<compile_context>
chip_gen: v6e
topology: v6e:2x2x1
jax: 0.10.0
libtpu: 0.0.40
codegen_flags: <defaults>
</compile_context>

<pallas_src>
import functools

import numpy as np
import jax
import jax.numpy as jnp
from jax.experimental import pallas as pl
from jax.experimental.pallas import tpu as pltpu


# ------------------------ geometry constants (host-side) ---------------------

@functools.lru_cache(maxsize=None)
def _blur_matrix(h, w):
    """(H*W, (H//2)*(W//2)): 3x3 binomial blur (/16), reflect-pad-1, stride-2."""
    def b1(n):
        f = np.array([1.0, 2.0, 1.0], np.float64) / 4.0
        bm = np.zeros((n, n // 2), np.float64)
        for o in range(n // 2):
            for d in range(3):
                i = 2 * o + d - 1
                i = -i if i < 0 else (2 * n - 2 - i if i >= n else i)   # reflect pad 1
                bm[i, o] += f[d]
        return bm
    # index [(y*W + x), (yo*wo + xo)] = Bh[y, yo] * Bw[x, xo]
    return np.kron(b1(h), b1(w)).astype(np.float32)


@functools.lru_cache(maxsize=None)
def _blur_matrix_packed(h, w, n):
    """Block-diagonal (N*H*W, N*(H//2)*(W//2)) version for the lane-packed batch."""
    return np.kron(np.eye(n, dtype=np.float32), _blur_matrix(h, w)).astype(np.float32)


@functools.lru_cache(maxsize=None)
def _conv3_masks_packed(h, w, n, c):
    """(9, C, N*H*W) 0/1 masks: is the (dy,dx) neighbour of each pixel inside its image.

    Pre-broadcast over channels (avoids an in-loop broadcast_in_dim) and tiled per image
    so lane rolls that wrap across image boundaries in the packed layout are zeroed.
    """
    ys, xs = np.meshgrid(np.arange(h), np.arange(w), indexing="ij")
    ys, xs = ys.reshape(-1), xs.reshape(-1)
    m = np.zeros((9, h * w), np.float32)
    for k in range(9):
        dy, dx = k // 3 - 1, k % 3 - 1
        m[k] = ((ys + dy >= 0) & (ys + dy < h)
                & (xs + dx >= 0) & (xs + dx < w)).astype(np.float32)
    m = np.tile(m, (1, n))                                         # (9, N*HW)
    m = np.broadcast_to(m[:, None, :], (9, c, n * h * w)).copy()   # (9, C, N*HW)
    return m


def _probe_roll_sign():
    """Convention guard for pltpu.roll (run once, OUTSIDE jit).

    Returns s such that pltpu.roll(v, (s * off) % n, axis=1)[..., m] == v[..., m + off]
    (circularly).  Wrapped lanes are always killed by the conv masks.
    """
    def probe(x_ref, o_ref):
        o_ref[...] = pltpu.roll(x_ref[...], 1, 1)

    x = jax.lax.broadcasted_iota(jnp.float32, (8, 128), 1)
    y = pl.pallas_call(probe, out_shape=jax.ShapeDtypeStruct((8, 128), jnp.float32))(x)
    return -1 if int(np.asarray(y)[0, 0]) == 127 else 1


# ------------------------------ fused kernel ----------------------------------

def _stage(x, w1t, w2t_ref, wtt, wbt, mask_ref, dmat, a1, a2, width, roll_sign):
    """One ResidualDownSample stage on the lane-packed slab x: (C, N*HW) -> (2C, N*HW/4)."""
    lanes = x.shape[1]

    # 1x1 conv + PReLU  (out^T = W^T @ x^T -> lane-dense result)
    t1 = jnp.dot(w1t, x, preferred_element_type=jnp.float32)
    t1 = jnp.where(t1 > 0, t1, a1 * t1)

    # 3x3 zero-padded conv: centre tap (k=4, shift 0, mask all-ones) seeds the
    # accumulator; the other 8 taps are masked lane rotations (XLU) + small MXU dots.
    acc = jnp.dot(w2t_ref[4], t1, preferred_element_type=jnp.float32)
    for k in range(9):
        if k == 4:
            continue
        dy, dx = k // 3 - 1, k % 3 - 1
        off = dy * width + dx                       # flat-index offset of tap k
        shift = (roll_sign * off) % lanes           # static rotate amount
        tap = pltpu.roll(t1, shift, 1)
        acc = acc + jnp.dot(w2t_ref[k], tap * mask_ref[k],
                            preferred_element_type=jnp.float32)
    t2 = jnp.where(acc > 0, acc, a2 * acc)

    # both final 1x1 convs (C -> 2C) + residual add at full resolution, then the
    # folded 3x3 blur (/16, reflect) + stride-2 downsample as one block-diag matmul.
    z = (jnp.dot(wtt, t2, preferred_element_type=jnp.float32)
         + jnp.dot(wbt, x, preferred_element_type=jnp.float32))      # (2C, N*HW)
    return jnp.dot(z, dmat, preferred_element_type=jnp.float32)      # (2C, N*HW/4)


def _fused_kernel(*refs, n_stages, widths, roll_sign):
    """All stages of DownSample for the whole (lane-packed) batch, VMEM-resident.

    refs = [x, (w1t, w2t, wtt, wbt, masks, dmat) * n_stages, alphas(SMEM), out].
    """
    x_ref = refs[0]
    alpha_ref = refs[1 + 6 * n_stages]
    o_ref = refs[2 + 6 * n_stages]

    x = x_ref[...]                                  # (C, N*H*W), lanes = N*H*W
    for s in range(n_stages):
        w1t, w2t, wtt, wbt, m, d = refs[1 + 6 * s: 7 + 6 * s]
        x = _stage(x, w1t[...], w2t, wtt[...], wbt[...], m, d[...],
                   alpha_ref[2 * s], alpha_ref[2 * s + 1],
                   widths[s], roll_sign)
    o_ref[...] = x


# --------------------------------- wrapper ------------------------------------

def down_sample(x_nchw, params, roll_sign):
    n, c, h, w = x_nchw.shape
    n_stages = len(params)

    # lane-packed, channels-major layout: (C, N*H*W)
    x_packed = jnp.transpose(x_nchw.reshape(n, c, h * w), (1, 0, 2)).reshape(c, n * h * w)

    inputs = [x_packed]
    in_specs = [pl.BlockSpec(memory_space=pltpu.MemorySpace.VMEM)]
    alphas, widths = [], []
    cs, hs, ws = c, h, w
    for (w1, a1, w2, a2, wt, wb) in params:
        w1t = jnp.transpose(w1)                                   # (C, C)
        w2t = jnp.transpose(w2.reshape(9, cs, cs), (0, 2, 1))     # (9, Co, Ci)
        wtt = jnp.transpose(wt)                                   # (2C, C)
        wbt = jnp.transpose(wb)                                   # (2C, C)
        masks = jnp.asarray(_conv3_masks_packed(hs, ws, n, cs))   # (9, C, N*HW)
        dmat = jnp.asarray(_blur_matrix_packed(hs, ws, n))        # (N*HW, N*HoWo)
        inputs += [w1t, w2t, wtt, wbt, masks, dmat]
        in_specs += [pl.BlockSpec(memory_space=pltpu.MemorySpace.VMEM)] * 6
        alphas += [a1, a2]
        widths.append(ws)
        cs, hs, ws = 2 * cs, hs // 2, ws // 2

    inputs.append(jnp.concatenate(alphas))                        # (2*n_stages,) PReLU alphas
    in_specs.append(pl.BlockSpec(memory_space=pltpu.MemorySpace.SMEM))

    kernel = functools.partial(_fused_kernel, n_stages=n_stages,
                               widths=tuple(widths), roll_sign=roll_sign)
    out_packed = pl.pallas_call(
        kernel,
        out_shape=jax.ShapeDtypeStruct((cs, n * hs * ws), jnp.float32),
        in_specs=in_specs,
        out_specs=pl.BlockSpec(memory_space=pltpu.MemorySpace.VMEM),
    )(*inputs)

    # unpack the lane-packed batch back to NCHW
    out = jnp.transpose(out_packed.reshape(cs, n, hs * ws), (1, 0, 2))
    return out.reshape(n, cs, hs, ws)


# ------------------------------ parameter init --------------------------------

def init_stage_params(key, c):
    k1, k2, k3, k4 = jax.random.split(key, 4)
    w1 = jax.random.normal(k1, (c, c), jnp.float32) / np.sqrt(c)
    w2 = jax.random.normal(k2, (9 * c, c), jnp.float32) / np.sqrt(9 * c)
    wt = jax.random.normal(k3, (c, 2 * c), jnp.float32) / np.sqrt(c)
    wb = jax.random.normal(k4, (c, 2 * c), jnp.float32) / np.sqrt(c)
    a1 = jnp.full((1,), 0.25, jnp.float32)   # nn.PReLU() default init
    a2 = jnp.full((1,), 0.25, jnp.float32)
    return (w1, a1, w2, a2, wt, wb)


def init_downsample_params(key, in_channels, scale_factor):
    n_stages = int(np.log2(scale_factor))
    params, c = [], in_channels
    for _ in range(n_stages):
        key, sub = jax.random.split(key)
        params.append(init_stage_params(sub, c))
        c *= 2
    return params


# ---------------------------- pure-JAX reference ------------------------------

def _prelu(x, a):
    return jnp.maximum(x, 0.0) + a * jnp.minimum(x, 0.0)


def ref_blur_downsample(x):
    n, h, w, c = x.shape
    ho, wo = h // 2, w // 2
    xp = jnp.pad(x, ((0, 0), (1, 1), (1, 1), (0, 0)), mode="reflect")
    f = jnp.array([1.0, 2.0, 1.0])
    f2 = jnp.outer(f, f) / 16.0
    out = jnp.zeros((n, ho, wo, c), jnp.float32)
    for dy in range(3):
        for dx in range(3):
            out = out + f2[dy, dx] * xp[:, dy:dy + 2 * ho:2, dx:dx + 2 * wo:2, :]
    return out


def ref_stage(x, p):
    w1, a1, w2, a2, wt, wb = p
    n, h, w, c = x.shape
    t1 = _prelu(jnp.einsum("nhwc,cd->nhwd", x, w1), a1[0])
    xz = jnp.pad(t1, ((0, 0), (1, 1), (1, 1), (0, 0)))
    w2r = w2.reshape(9, c, c)
    conv = jnp.zeros((n, h, w, c), jnp.float32)
    for k in range(9):
        dy, dx = divmod(k, 3)
        conv = conv + jnp.einsum("nhwc,cd->nhwd", xz[:, dy:dy + h, dx:dx + w, :], w2r[k])
    t2 = _prelu(conv, a2[0])
    t3 = ref_blur_downsample(t2)
    b3 = ref_blur_downsample(x)
    return jnp.einsum("nhwc,cd->nhwd", t3, wt) + jnp.einsum("nhwc,cd->nhwd", b3, wb)


# ----------------------------------- main --------------------------------------

if __name__ == "__main__":
    key = jax.random.PRNGKey(0)
    in_channels, scale_factor = 4, 4          # log2(4) = 2 ResidualDownSample stages
    n, h, w = 2, 16, 16

    kx, kp = jax.random.split(key)
    x_nchw = jax.random.normal(kx, (n, in_channels, h, w), jnp.float32)
    params = init_downsample_params(kp, in_channels, scale_factor)

    roll_sign = _probe_roll_sign()            # one tiny probe kernel, outside jit

    fwd = jax.jit(lambda x: down_sample(x, params, roll_sign))
    out_nchw = jax.block_until_ready(fwd(x_nchw))

    # pure-JAX reference check
    ref = jnp.transpose(x_nchw, (0, 2, 3, 1))
    for p in params:
        ref = ref_stage(ref, p)
    ref_nchw = jnp.transpose(ref, (0, 3, 1, 2))

    assert out_nchw.shape == (n, in_channels * scale_factor,
                              h // scale_factor, w // scale_factor)
    np.testing.assert_allclose(np.asarray(out_nchw), np.asarray(ref_nchw),
                               rtol=2e-4, atol=2e-4)
    print("KERNEL_OK")
</pallas_src>

<mosaic_0001>
module attributes {stable_mosaic.version = 11 : i64} {
  func.func @probe(%arg0: memref<8x128xf32, #tpu.memory_space<vmem>>, %arg1: memref<8x128xf32, #tpu.memory_space<vmem>>) attributes {dimension_semantics = [], scalar_prefetch = 0 : i64, scratch_operands = 0 : i64, tpu.core_type = #tpu.core_type<tc>} {
    %c0 = arith.constant 0 : index
    %c0_0 = arith.constant 0 : index
    %0 = vector.load %arg0[%c0, %c0_0] : memref<8x128xf32, #tpu.memory_space<vmem>>, vector<8x128xf32>
    %c1_i32 = arith.constant 1 : i32
    %1 = tpu.dynamic_rotate %0 by %c1_i32 dim 1 : vector<8x128xf32>, i32 -> vector<8x128xf32>
    %c0_1 = arith.constant 0 : index
    %c0_2 = arith.constant 0 : index
    %2 = vector.load %arg1[%c0_1, %c0_2] : memref<8x128xf32, #tpu.memory_space<vmem>>, vector<8x128xf32>
    tpu.vector_store %arg1[%c0_1, %c0_2], %1 {strides = array<i32>} : memref<8x128xf32, #tpu.memory_space<vmem>>, vector<8x128xf32>,
    return
  }
}

</mosaic_0001>

<llo_original>
// kernel: tpu_custom_call.1
$region0: #{tpu_custom_call.1}
  #allocation0 [shape = 'u32[]', space=smem, size = 0x4, offset = 0x4, fixed_abs, tag = 'smem constant byte address 0x4 - core index']
  #allocation1 [shape = 'u32[144,128]{1,0:T(1,128)}', space=vmem, size = 0x12000, scoped, tag = 'internal scratch']
  %s0 = inlined_call_operand.hbm [shape: f32[8,128], index: 0, kind: input, shape index: {}]
  %s1 = inlined_call_operand.hbm [shape: f32[8,128], index: 1, kind: output, shape index: {}]
  %s2 = sld [smem:[#allocation0]]
  $region18: #{tpu_custom_call.1} parent=0
    _
  %s4 = ssub.s32 1, %s2
  %s5 = scalar_select 0, %s4, %s2
  $region1: #{tpu_custom_call.1} parent=0
    #allocation2 [shape = 'u8[4096]{0}', space=vmem, size = 0x1000, scoped, tag = 'input window, operand 0, single buffered']
    #allocation3 [shape = 's32[1]{0}', space=sflag, size = 0x4, scoped, tag = 'scoped memory for tpu_custom_call.1']
    #allocation4 [shape = 's32[1]{0}', space=sflag, size = 0x4, scoped, tag = 'scoped memory for tpu_custom_call.1']
    #allocation5 [shape = 'u8[4096]{0}', space=vmem, size = 0x1000, scoped, tag = 'output window, operand 0, single buffered']
    %6 = vsyncpa [#allocation3], 0
    %7 = vsyncpa [#allocation4], 0
    // Predicated region
    $region2: #{tpu_custom_call.1} parent=1 // pred_check
      _
    $region3: #{tpu_custom_call.1} parent=1 // pred_check_branch
      %9 = sbr.rel (0) target = $region5
    $region4: #{tpu_custom_call.1} parent=1 // pred_region
      %s11 = ssub.s32 128, 128
      %12 = vsyncadd [#allocation3], %s11
      %s14 = sshll.u32 [#allocation2], 4
      %s15 = int_to_ptr.vmem [resolvable:$true] %s14
      %17 = dma.hbm_to_vmem [thread:$0]  %s0, 128, %s15, [#allocation3]
    $region5: #{tpu_custom_call.1} parent=1 // pred_fallthru
      _
    // Predicated region
    $region6: #{tpu_custom_call.1} parent=1 // pred_check
      _
    $region7: #{tpu_custom_call.1} parent=1 // pred_check_branch
      %19 = sbr.rel (0) target = $region9
    $region8: #{tpu_custom_call.1} parent=1 // pred_region
      %20 = dma.done [#allocation3], 128
    $region9: #{tpu_custom_call.1} parent=1 // pred_fallthru
      _
    %v21 = vld [vmem:[#allocation2] sm:$0xff]
    %22 = vrot.lane.b32.xlu0 %v21, 1
    %v23 = vpop.permute.xlu0 %22
    %24 = vst [vmem:[#allocation5] sm:$0xff] %v23
    // Predicated region
    $region10: #{tpu_custom_call.1} parent=1 // pred_check
      _
    $region11: #{tpu_custom_call.1} parent=1 // pred_check_branch
      %26 = sbr.rel (0) target = $region13
    $region12: #{tpu_custom_call.1} parent=1 // pred_region
      %s28 = ssub.s32 128, 128
      %29 = vsyncadd [#allocation4], %s28
      %s31 = sshll.u32 [#allocation5], 4
      %s32 = int_to_ptr.vmem [resolvable:$true] %s31
      %34 = dma.vmem_to_hbm [thread:$0]  %s32, 128, %s1, [#allocation4]
    $region13: #{tpu_custom_call.1} parent=1 // pred_fallthru
      _
    // Predicated region
    $region14: #{tpu_custom_call.1} parent=1 // pred_check
      _
    $region15: #{tpu_custom_call.1} parent=1 // pred_check_branch
      %36 = sbr.rel (0) target = $region17
    $region16: #{tpu_custom_call.1} parent=1 // pred_region
      %37 = dma.done [#allocation4], 128
    $region17: #{tpu_custom_call.1} parent=1 // pred_fallthru
      _
    %38 = vsyncpa [#allocation3], 1
    %39 = vsyncpa [#allocation4], 1

</llo_original>
